<compile_context>
chip_gen: v5e
topology: v5e:2x2
jax: 0.10.0
libtpu: 0.0.40
codegen_flags: <defaults>
</compile_context>

<pallas_src>
import jax
import jax.numpy as jnp
from jax.experimental import pallas as pl
from jax.experimental.pallas import tpu as pltpu

INPUT_DIM = 2
LAYER_DIM = 16                 # per-branch hidden width
FUSED_DIM = 2 * LAYER_DIM      # 32 : mu lanes 0:16, sigma lanes 16:32
OUTPUT_DIM = 32                # per-branch output width
FUSED_OUT = 2 * OUTPUT_DIM     # 64 : mu lanes 0:32, sigma lanes 32:64
BN_EPS = 1e-5

# Single packed-slab layout (sublane-aligned weight blocks, 80 rows = 10*8).
#   rows  0:2   fused W1 (2,32)          in cols 0:32
#   rows  8:40  block-diag W2 (32,32)    in cols 0:32
#   rows 40:72  block-diag W3 (32,64)    in cols 0:64
#   row  72 gamma1 | 73 beta1 | 74 gamma2 | 75 beta2   (cols 0:32)
#   row  76 b3 = [b3_mu || b3_sigma]                    (cols 0:64)
_SLAB_SHAPE = (80, 64)


def _bn_relu_fused(h, gamma, beta):
    """Training-mode BatchNorm1d over axis 0 + ReLU, affine folded.

    Stats are single-pass (mean and E[h^2] together); scale/shift are computed
    on the narrow (1,32) vectors so only two wide ops + the ReLU max touch the
    (B,32) activation.
    """
    mean = jnp.mean(h, axis=0, keepdims=True)
    ex2 = jnp.mean(h * h, axis=0, keepdims=True)
    var = ex2 - mean * mean                            # biased variance
    scale = gamma * jax.lax.rsqrt(var + BN_EPS)        # (1, C) narrow
    shift = beta - mean * scale                        # (1, C) narrow
    return jnp.maximum(h * scale + shift, 0.0)         # 3 wide ops total


def lambda_mlp_kernel(x_ref, p_ref, mu_ref, sigma_ref):
    x = x_ref[...].astype(jnp.float32)                 # (B, 2)

    # ---- layer 1: one tiny K=2 MXU push (MXU is idle; avoids the two
    #      cross-lane broadcasts of the VPU outer-product formulation).
    #      Bias is BN-cancelled.
    w1 = p_ref[0:2, 0:FUSED_DIM]                       # (2, 32)
    h = jnp.dot(x, w1, preferred_element_type=jnp.float32)          # (B, 32)
    h = _bn_relu_fused(h, p_ref[72:73, 0:FUSED_DIM], p_ref[73:74, 0:FUSED_DIM])

    # ---- layer 2: one block-diagonal matmul for both branches
    w2 = p_ref[8:40, 0:FUSED_DIM]                      # (32, 32)
    h = jnp.dot(h, w2, preferred_element_type=jnp.float32)          # (B, 32)
    h = _bn_relu_fused(h, p_ref[74:75, 0:FUSED_DIM], p_ref[75:76, 0:FUSED_DIM])

    # ---- layer 3: one block-diagonal matmul, split into mu / sigma outputs
    w3 = p_ref[40:72, 0:FUSED_OUT]                     # (32, 64)
    b3 = p_ref[76:77, 0:FUSED_OUT]                     # (1, 64)
    out = jnp.dot(h, w3, preferred_element_type=jnp.float32) + b3   # (B, 64)
    mu_ref[...] = out[:, :OUTPUT_DIM].astype(mu_ref.dtype)
    sigma_ref[...] = out[:, OUTPUT_DIM:].astype(sigma_ref.dtype)


def lambda_mlp_forward(x, param_slab):
    """Returns (mu, sigma), each (B, OUTPUT_DIM); both written by the kernel."""
    B = x.shape[0]
    vmem = pl.BlockSpec(memory_space=pltpu.MemorySpace.VMEM)
    cost = pl.CostEstimate(
        flops=2 * B * (INPUT_DIM * FUSED_DIM
                       + FUSED_DIM * FUSED_DIM
                       + FUSED_DIM * FUSED_OUT),
        transcendentals=2 * FUSED_DIM,                 # two rsqrt over 32 cols
        bytes_accessed=4 * (x.size + param_slab.size + 2 * B * OUTPUT_DIM),
    )
    mu, sigma = pl.pallas_call(
        lambda_mlp_kernel,
        out_shape=(jax.ShapeDtypeStruct((B, OUTPUT_DIM), jnp.float32),
                   jax.ShapeDtypeStruct((B, OUTPUT_DIM), jnp.float32)),
        in_specs=[vmem, vmem],
        out_specs=(vmem, vmem),
        cost_estimate=cost,
    )(x, param_slab)
    return mu, sigma


# --------------------------------------------------------------------------
# Parameter construction / packing / pure-JAX reference
# --------------------------------------------------------------------------
def init_params(key):
    """PyTorch-style init; returns the flat per-branch parameter list."""
    def linear(key, fan_in, fan_out):
        k1, k2 = jax.random.split(key)
        bound = 1.0 / jnp.sqrt(fan_in)
        w = jax.random.uniform(k1, (fan_in, fan_out), jnp.float32, -bound, bound)
        b = jax.random.uniform(k2, (1, fan_out), jnp.float32, -bound, bound)
        return w, b

    keys = jax.random.split(key, 6)
    params = []
    for branch_keys in (keys[:3], keys[3:]):
        w1, b1 = linear(branch_keys[0], INPUT_DIM, LAYER_DIM)
        w2, b2 = linear(branch_keys[1], LAYER_DIM, LAYER_DIM)
        w3, b3 = linear(branch_keys[2], LAYER_DIM, OUTPUT_DIM)
        g1 = jnp.ones((1, LAYER_DIM), jnp.float32)
        be1 = jnp.zeros((1, LAYER_DIM), jnp.float32)
        g2 = jnp.ones((1, LAYER_DIM), jnp.float32)
        be2 = jnp.zeros((1, LAYER_DIM), jnp.float32)
        params += [w1, b1, g1, be1, w2, b2, g2, be2, w3, b3]
    return params


def pack_params(params):
    """Pack the 20 per-branch tensors into ONE (80,64) slab for the kernel.

    Layer-1/2 linear biases are intentionally dropped: training-mode BN
    subtracts the batch mean, so a preceding additive bias has no effect.
    NOTE: this is only exact for training-mode BatchNorm; eval-mode running
    statistics would require keeping the biases.
    """
    (w1m, _b1m, g1m, be1m, w2m, _b2m, g2m, be2m, w3m, b3m,
     w1s, _b1s, g1s, be1s, w2s, _b2s, g2s, be2s, w3s, b3s) = params

    w1 = jnp.concatenate([w1m, w1s], axis=1)                      # (2, 32)
    w2 = jnp.zeros((FUSED_DIM, FUSED_DIM), jnp.float32)
    w2 = w2.at[0:16, 0:16].set(w2m).at[16:32, 16:32].set(w2s)     # block-diag
    w3 = jnp.zeros((FUSED_DIM, FUSED_OUT), jnp.float32)
    w3 = w3.at[0:16, 0:32].set(w3m).at[16:32, 32:64].set(w3s)     # block-diag

    slab = jnp.zeros(_SLAB_SHAPE, jnp.float32)
    slab = slab.at[0:2, 0:FUSED_DIM].set(w1)
    slab = slab.at[8:40, 0:FUSED_DIM].set(w2)
    slab = slab.at[40:72, 0:FUSED_OUT].set(w3)
    slab = slab.at[72, 0:FUSED_DIM].set(jnp.concatenate([g1m, g1s], 1)[0])
    slab = slab.at[73, 0:FUSED_DIM].set(jnp.concatenate([be1m, be1s], 1)[0])
    slab = slab.at[74, 0:FUSED_DIM].set(jnp.concatenate([g2m, g2s], 1)[0])
    slab = slab.at[75, 0:FUSED_DIM].set(jnp.concatenate([be2m, be2s], 1)[0])
    slab = slab.at[76, 0:FUSED_OUT].set(jnp.concatenate([b3m, b3s], 1)[0])
    return slab


def reference_forward(x, params):
    """Pure-JAX reference matching the original PyTorch module exactly
    (separate branches, biases everywhere, two-pass BN variance)."""
    (w1m, b1m, g1m, be1m, w2m, b2m, g2m, be2m, w3m, b3m,
     w1s, b1s, g1s, be1s, w2s, b2s, g2s, be2s, w3s, b3s) = params

    def bn_relu(h, gamma, beta):
        mean = jnp.mean(h, axis=0, keepdims=True)
        var = jnp.mean((h - mean) ** 2, axis=0, keepdims=True)
        h_hat = (h - mean) * jax.lax.rsqrt(var + BN_EPS)
        return jnp.maximum(h_hat * gamma + beta, 0.0)

    def branch(w1, b1, g1, be1, w2, b2, g2, be2, w3, b3):
        h = x @ w1 + b1
        h = bn_relu(h, g1, be1)
        h = h @ w2 + b2
        h = bn_relu(h, g2, be2)
        return h @ w3 + b3

    mu = branch(w1m, b1m, g1m, be1m, w2m, b2m, g2m, be2m, w3m, b3m)
    sigma = branch(w1s, b1s, g1s, be1s, w2s, b2s, g2s, be2s, w3s, b3s)
    return mu, sigma


if __name__ == "__main__":
    key = jax.random.PRNGKey(0)
    k_x, k_p = jax.random.split(key)

    B = 8  # batch size (>1 required by training-mode BatchNorm1d)
    x = jax.random.normal(k_x, (B, INPUT_DIM), jnp.float32)
    params = init_params(k_p)
    param_slab = pack_params(params)

    mu, sigma = lambda_mlp_forward(x, param_slab)
    jax.block_until_ready((mu, sigma))

    mu_ref, sigma_ref = reference_forward(x, params)
    assert mu.shape == (B, OUTPUT_DIM) and sigma.shape == (B, OUTPUT_DIM)
    assert jnp.allclose(mu, mu_ref, atol=1e-4, rtol=1e-4)
    assert jnp.allclose(sigma, sigma_ref, atol=1e-4, rtol=1e-4)

    # TODO(synk): if B is ever scaled up, add a "parallel" batch grid axis
    # (uses v7x's second TensorCore) and accumulate BatchNorm (sum, sum-of-
    # squares) partials across batch tiles before normalizing, otherwise the
    # per-tile statistics diverge from full-batch training-mode BN.

    print("KERNEL_OK")
</pallas_src>

<mosaic_0001>
module attributes {stable_mosaic.version = 11 : i64} {
  func.func @lambda_mlp_kernel(%arg0: memref<8x2xf32, #tpu.memory_space<vmem>>, %arg1: memref<80x64xf32, #tpu.memory_space<vmem>>, %arg2: memref<8x32xf32, #tpu.memory_space<vmem>>, %arg3: memref<8x32xf32, #tpu.memory_space<vmem>>) attributes {dimension_semantics = [], scalar_prefetch = 0 : i64, scratch_operands = 0 : i64, tpu.core_type = #tpu.core_type<tc>} {
    %c0 = arith.constant 0 : index
    %c0_0 = arith.constant 0 : index
    %0 = vector.load %arg0[%c0, %c0_0] : memref<8x2xf32, #tpu.memory_space<vmem>>, vector<8x2xf32>
    %c0_1 = arith.constant 0 : index
    %c0_2 = arith.constant 0 : index
    %1 = vector.load %arg1[%c0_1, %c0_2] : memref<80x64xf32, #tpu.memory_space<vmem>>, vector<2x32xf32>
    %cst = arith.constant dense<0.000000e+00> : vector<8x32xf32>
    %2 = tpu.matmul %0, %1, %cst {dimension_numbers = #tpu.dot_dimension_numbers<[1], [0], [0], [1], [0, 0, 1, 1], [], []>} : vector<8x2xf32>, vector<2x32xf32>, vector<8x32xf32> -> vector<8x32xf32>
    %c72 = arith.constant 72 : index
    %c0_3 = arith.constant 0 : index
    %3 = vector.load %arg1[%c72, %c0_3] : memref<80x64xf32, #tpu.memory_space<vmem>>, vector<1x32xf32>
    %c73 = arith.constant 73 : index
    %c0_4 = arith.constant 0 : index
    %4 = vector.load %arg1[%c73, %c0_4] : memref<80x64xf32, #tpu.memory_space<vmem>>, vector<1x32xf32>
    %cst_5 = arith.constant dense<0.000000e+00> : vector<32xf32>
    %5 = vector.multi_reduction <add>, %2, %cst_5 [0] : vector<8x32xf32> to vector<32xf32>
    %6 = vector.shape_cast %5 : vector<32xf32> to vector<1x32xf32>
    %cst_6 = arith.constant 8.000000e+00 : f32
    %7 = vector.broadcast %cst_6 : f32 to vector<1x32xf32>
    %8 = arith.divf %6, %7 : vector<1x32xf32>
    %9 = arith.mulf %2, %2 : vector<8x32xf32>
    %cst_7 = arith.constant dense<0.000000e+00> : vector<32xf32>
    %10 = vector.multi_reduction <add>, %9, %cst_7 [0] : vector<8x32xf32> to vector<32xf32>
    %11 = vector.shape_cast %10 : vector<32xf32> to vector<1x32xf32>
    %cst_8 = arith.constant 8.000000e+00 : f32
    %12 = vector.broadcast %cst_8 : f32 to vector<1x32xf32>
    %13 = arith.divf %11, %12 : vector<1x32xf32>
    %14 = arith.mulf %8, %8 : vector<1x32xf32>
    %15 = arith.subf %13, %14 : vector<1x32xf32>
    %cst_9 = arith.constant 9.99999974E-6 : f32
    %16 = vector.broadcast %cst_9 : f32 to vector<1x32xf32>
    %17 = arith.addf %15, %16 : vector<1x32xf32>
    %18 = math.rsqrt %17 : vector<1x32xf32>
    %19 = arith.mulf %3, %18 : vector<1x32xf32>
    %20 = arith.mulf %8, %19 : vector<1x32xf32>
    %21 = arith.subf %4, %20 : vector<1x32xf32>
    %22 = vector.broadcast %19 : vector<1x32xf32> to vector<8x32xf32>
    %23 = arith.mulf %2, %22 : vector<8x32xf32>
    %24 = vector.broadcast %21 : vector<1x32xf32> to vector<8x32xf32>
    %25 = arith.addf %23, %24 : vector<8x32xf32>
    %cst_10 = arith.constant 0.000000e+00 : f32
    %26 = vector.broadcast %cst_10 : f32 to vector<8x32xf32>
    %27 = arith.maximumf %25, %26 : vector<8x32xf32>
    %c8 = arith.constant 8 : index
    %c0_11 = arith.constant 0 : index
    %28 = vector.load %arg1[%c8, %c0_11] : memref<80x64xf32, #tpu.memory_space<vmem>>, vector<32x32xf32>
    %cst_12 = arith.constant dense<0.000000e+00> : vector<8x32xf32>
    %29 = tpu.matmul %27, %28, %cst_12 {dimension_numbers = #tpu.dot_dimension_numbers<[1], [0], [0], [1], [0, 0, 1, 1], [], []>} : vector<8x32xf32>, vector<32x32xf32>, vector<8x32xf32> -> vector<8x32xf32>
    %c74 = arith.constant 74 : index
    %c0_13 = arith.constant 0 : index
    %30 = vector.load %arg1[%c74, %c0_13] : memref<80x64xf32, #tpu.memory_space<vmem>>, vector<1x32xf32>
    %c75 = arith.constant 75 : index
    %c0_14 = arith.constant 0 : index
    %31 = vector.load %arg1[%c75, %c0_14] : memref<80x64xf32, #tpu.memory_space<vmem>>, vector<1x32xf32>
    %cst_15 = arith.constant dense<0.000000e+00> : vector<32xf32>
    %32 = vector.multi_reduction <add>, %29, %cst_15 [0] : vector<8x32xf32> to vector<32xf32>
    %33 = vector.shape_cast %32 : vector<32xf32> to vector<1x32xf32>
    %cst_16 = arith.constant 8.000000e+00 : f32
    %34 = vector.broadcast %cst_16 : f32 to vector<1x32xf32>
    %35 = arith.divf %33, %34 : vector<1x32xf32>
    %36 = arith.mulf %29, %29 : vector<8x32xf32>
    %cst_17 = arith.constant dense<0.000000e+00> : vector<32xf32>
    %37 = vector.multi_reduction <add>, %36, %cst_17 [0] : vector<8x32xf32> to vector<32xf32>
    %38 = vector.shape_cast %37 : vector<32xf32> to vector<1x32xf32>
    %cst_18 = arith.constant 8.000000e+00 : f32
    %39 = vector.broadcast %cst_18 : f32 to vector<1x32xf32>
    %40 = arith.divf %38, %39 : vector<1x32xf32>
    %41 = arith.mulf %35, %35 : vector<1x32xf32>
    %42 = arith.subf %40, %41 : vector<1x32xf32>
    %cst_19 = arith.constant 9.99999974E-6 : f32
    %43 = vector.broadcast %cst_19 : f32 to vector<1x32xf32>
    %44 = arith.addf %42, %43 : vector<1x32xf32>
    %45 = math.rsqrt %44 : vector<1x32xf32>
    %46 = arith.mulf %30, %45 : vector<1x32xf32>
    %47 = arith.mulf %35, %46 : vector<1x32xf32>
    %48 = arith.subf %31, %47 : vector<1x32xf32>
    %49 = vector.broadcast %46 : vector<1x32xf32> to vector<8x32xf32>
    %50 = arith.mulf %29, %49 : vector<8x32xf32>
    %51 = vector.broadcast %48 : vector<1x32xf32> to vector<8x32xf32>
    %52 = arith.addf %50, %51 : vector<8x32xf32>
    %cst_20 = arith.constant 0.000000e+00 : f32
    %53 = vector.broadcast %cst_20 : f32 to vector<8x32xf32>
    %54 = arith.maximumf %52, %53 : vector<8x32xf32>
    %c40 = arith.constant 40 : index
    %c0_21 = arith.constant 0 : index
    %55 = vector.load %arg1[%c40, %c0_21] : memref<80x64xf32, #tpu.memory_space<vmem>>, vector<32x64xf32>
    %c76 = arith.constant 76 : index
    %c0_22 = arith.constant 0 : index
    %56 = vector.load %arg1[%c76, %c0_22] : memref<80x64xf32, #tpu.memory_space<vmem>>, vector<1x64xf32>
    %cst_23 = arith.constant dense<0.000000e+00> : vector<8x64xf32>
    %57 = tpu.matmul %54, %55, %cst_23 {dimension_numbers = #tpu.dot_dimension_numbers<[1], [0], [0], [1], [0, 0, 1, 1], [], []>} : vector<8x32xf32>, vector<32x64xf32>, vector<8x64xf32> -> vector<8x64xf32>
    %58 = vector.broadcast %56 : vector<1x64xf32> to vector<8x64xf32>
    %59 = arith.addf %57, %58 : vector<8x64xf32>
    %60 = vector.extract_strided_slice %59 {offsets = [0, 0], sizes = [8, 32], strides = [1, 1]} : vector<8x64xf32> to vector<8x32xf32>
    %c0_24 = arith.constant 0 : index
    %c0_25 = arith.constant 0 : index
    %61 = vector.load %arg2[%c0_24, %c0_25] : memref<8x32xf32, #tpu.memory_space<vmem>>, vector<8x32xf32>
    tpu.vector_store %arg2[%c0_24, %c0_25], %60 {strides = array<i32>} : memref<8x32xf32, #tpu.memory_space<vmem>>, vector<8x32xf32>,
    %62 = vector.extract_strided_slice %59 {offsets = [0, 32], sizes = [8, 32], strides = [1, 1]} : vector<8x64xf32> to vector<8x32xf32>
    %c0_26 = arith.constant 0 : index
    %c0_27 = arith.constant 0 : index
    %63 = vector.load %arg3[%c0_26, %c0_27] : memref<8x32xf32, #tpu.memory_space<vmem>>, vector<8x32xf32>
    tpu.vector_store %arg3[%c0_26, %c0_27], %62 {strides = array<i32>} : memref<8x32xf32, #tpu.memory_space<vmem>>, vector<8x32xf32>,
    return
  }
}

</mosaic_0001>

<llo_original>
// kernel: tpu_custom_call.1
$region0: #{tpu_custom_call.1}
  #allocation0 [shape = 'u32[]', space=smem, size = 0x4, offset = 0x4, fixed_abs, tag = 'smem constant byte address 0x4 - core index']
  #allocation1 [shape = 'u32[72,128]{1,0:T(1,128)}', space=vmem, size = 0x9000, scoped, tag = 'internal scratch']
  %s0 = inlined_call_operand.vmem [shape: f32[8,2], index: 0, kind: input, shape index: {}]
  %s1 = inlined_call_operand.vmem [shape: f32[80,64], index: 1, kind: input, shape index: {}]
  %s2 = inlined_call_operand.hbm [shape: f32[8,32], index: 2, kind: output, shape index: {0}]
  %s3 = inlined_call_operand.hbm [shape: f32[8,32], index: 3, kind: output, shape index: {1}]
  %4 = xla_tuple %s2, %s3
  %s5 = sld [smem:[#allocation0]]
  $region26: #{tpu_custom_call.1} parent=0
    _
  %s7 = ssub.s32 1, %s5
  %s8 = scalar_select 0, %s7, %s5
  $region1: #{tpu_custom_call.1} parent=0
    #allocation2 [shape = 'u8[4096]{0}', space=vmem, size = 0x1000, scoped, tag = 'output window, operand 0, single buffered']
    #allocation3 [shape = 's32[1]{0}', space=sflag, size = 0x4, scoped, tag = 'scoped memory for tpu_custom_call.1']
    #allocation4 [shape = 'u8[4096]{0}', space=vmem, size = 0x1000, scoped, tag = 'output window, operand 1, single buffered']
    #allocation5 [shape = 's32[1]{0}', space=sflag, size = 0x4, scoped, tag = 'scoped memory for tpu_custom_call.1']
    %9 = vsyncpa [#allocation3], 0
    %10 = vsyncpa [#allocation5], 0
    // Predicated region
    $region2: #{tpu_custom_call.1} parent=1 // pred_check
      _
    $region3: #{tpu_custom_call.1} parent=1 // pred_check_branch
      %12 = sbr.rel (0) target = $region5
    $region4: #{tpu_custom_call.1} parent=1 // pred_region
      _
    $region5: #{tpu_custom_call.1} parent=1 // pred_fallthru
      _
    // Predicated region
    $region6: #{tpu_custom_call.1} parent=1 // pred_check
      _
    $region7: #{tpu_custom_call.1} parent=1 // pred_check_branch
      %14 = sbr.rel (0) target = $region9
    $region8: #{tpu_custom_call.1} parent=1 // pred_region
      _
    $region9: #{tpu_custom_call.1} parent=1 // pred_fallthru
      _
    %v15 = vld [vmem:[%s0] sm:$0xff]
    %v16 = vld [vmem:[%s1] sm:$0x3]
    %vm17 = vcmask 15360
    %v19 = vsel %vm17, %v15, 0
    %vm21 = vcmask 1041408
    %v23 = vsel %vm21, %v16, 0
    %25 = vmatpush.msra.mxu0 0.0
    %26 = vmatpush.msra.mxu0 0.0
    %27 = vmatpush.msra.mxu0 0.0
    %28 = vmatpush.msra.mxu0 0.0
    %29 = vmatpush.msra.mxu0 0.0
    %30 = vmatpush.msra.mxu0 0.0
    %31 = vmatpush.msra.mxu0 0.0
    %32 = vmatpush.msra.mxu0 0.0
    %33 = vmatpush.msra.mxu0 0.0
    %34 = vmatpush.msra.mxu0 0.0
    %35 = vmatpush.msra.mxu0 0.0
    %36 = vmatpush.msra.mxu0 0.0
    %37 = vmatpush.msra.mxu0 0.0
    %38 = vmatpush.msra.mxu0 0.0
    %39 = vmatpush.msra.mxu0 0.0
    %40 = vmatpush.msra.mxu0 %v23
    %41 = vmatmul.f32.gmra.mxu0 %v19
    %v42 = vpop.f32.mrf.mxu0
    %v43 = vadd.f32 0.0, %v42
    %44 = vdwg.mxu0
    %v45 = vld [vmem:[%s1 + $0x48] sm:$0x1]
    %v46 = vld [vmem:[%s1 + $0x49] sm:$0x1]
    %vm47 = vcmask 261120
    %v48 = vsel %vm47, %v43, 0.0
    %v49 = vrot.slane %v48, 4
    %v50 = vadd.f32 %v48, %v49
    %v51 = vrot.slane %v50, 2
    %v52 = vadd.f32 %v50, %v51
    %v53 = vrot.slane %v52, 1
    %v54 = vadd.f32 %v52, %v53
    %v55 = vrcp.pop 8.0
    %v56 = vmul.f32 8.0, %v55
    %v57 = vsub.f32 1.0, %v56
    %v58 = vmul.f32 %v55, %v57
    %v59 = vadd.f32 %v55, %v58
    %vm60 = vweird.f32 %v55
    %v61 = vsel %vm60, %v55, %v59
    %v62 = vmul.f32 %v54, %v61
    %v63 = vmul.f32 %v43, %v43
    %v64 = vsel %vm47, %v63, 0.0
    %v65 = vrot.slane %v64, 4
    %v66 = vadd.f32 %v64, %v65
    %v67 = vrot.slane %v66, 2
    %v68 = vadd.f32 %v66, %v67
    %v69 = vrot.slane %v68, 1
    %v70 = vadd.f32 %v68, %v69
    %v71 = vmul.f32 %v70, %v61
    %v72 = vmul.f32 %v62, %v62
    %v73 = vsub.f32 %v71, %v72
    %v74 = vadd.f32 %v73, 1e-05
    %v75 = vrsqrt.pop %v74
    %v76 = vmul.f32 %v75, %v74
    %v77 = vmul.f32 %v76, %v75
    %v78 = vmul.f32 0.5, %v77
    %v79 = vsub.f32 1.5, %v78
    %v80 = vmul.f32 %v75, %v79
    %vm81 = vweird.f32 %v74
    %vm82 = vweird.f32 %v75
    %vm83 = vmor %vm81, %vm82
    %v84 = vsel %vm83, %v75, %v80
    %v85 = vmul.f32 %v45, %v84
    %v86 = vmul.f32 %v62, %v85
    %v87 = vsub.f32 %v46, %v86
    %v88 = vperm.slane %v85, 0
    %v89 = vmul.f32 %v43, %v88
    %v90 = vperm.slane %v87, 0
    %v91 = vadd.f32 %v89, %v90
    %v92 = vmax.f32 %v91, 0.0
    %v93 = vld [vmem:[%s1 + $0x8] sm:$0xff]
    %v94 = vld [vmem:[%s1 + $0x10] sm:$0xff]
    %v95 = vld [vmem:[%s1 + $0x18] sm:$0xff]
    %v96 = vld [vmem:[%s1 + $0x20] sm:$0xff]
    %v98 = vsel %vm47, %v92, 0
    %100 = vmatpush.msra.mxu0 0.0
    %101 = vmatpush.msra.mxu0 0.0
    %102 = vmatpush.msra.mxu0 0.0
    %103 = vmatpush.msra.mxu0 0.0
    %104 = vmatpush.msra.mxu0 0.0
    %105 = vmatpush.msra.mxu0 0.0
    %106 = vmatpush.msra.mxu0 0.0
    %107 = vmatpush.msra.mxu0 0.0
    %108 = vmatpush.msra.mxu0 0.0
    %109 = vmatpush.msra.mxu0 0.0
    %110 = vmatpush.msra.mxu0 0.0
    %111 = vmatpush.msra.mxu0 0.0
    %112 = vmatpush.msra.mxu0 %v96
    %113 = vmatpush.msra.mxu0 %v95
    %114 = vmatpush.msra.mxu0 %v94
    %115 = vmatpush.msra.mxu0 %v93
    %116 = vmatmul.f32.gmra.mxu0 %v98
    %v117 = vpop.f32.mrf.mxu0
    %v118 = vadd.f32 0.0, %v117
    %119 = vdwg.mxu0
    %v120 = vld [vmem:[%s1 + $0x4a] sm:$0x1]
    %v121 = vld [vmem:[%s1 + $0x4b] sm:$0x1]
    %v122 = vsel %vm47, %v118, 0.0
    %v123 = vrot.slane %v122, 4
    %v124 = vadd.f32 %v122, %v123
    %v125 = vrot.slane %v124, 2
    %v126 = vadd.f32 %v124, %v125
    %v127 = vrot.slane %v126, 1
    %v128 = vadd.f32 %v126, %v127
    %v129 = vmul.f32 %v128, %v61
    %v130 = vmul.f32 %v118, %v118
    %v131 = vsel %vm47, %v130, 0.0
    %v132 = vrot.slane %v131, 4
    %v133 = vadd.f32 %v131, %v132
    %v134 = vrot.slane %v133, 2
    %v135 = vadd.f32 %v133, %v134
    %v136 = vrot.slane %v135, 1
    %v137 = vadd.f32 %v135, %v136
    %v138 = vmul.f32 %v137, %v61
    %v139 = vmul.f32 %v129, %v129
    %v140 = vsub.f32 %v138, %v139
    %v141 = vadd.f32 %v140, 1e-05
    %v142 = vrsqrt.pop %v141
    %v143 = vmul.f32 %v142, %v141
    %v144 = vmul.f32 %v143, %v142
    %v145 = vmul.f32 0.5, %v144
    %v146 = vsub.f32 1.5, %v145
    %v147 = vmul.f32 %v142, %v146
    %vm148 = vweird.f32 %v141
    %vm149 = vweird.f32 %v142
    %vm150 = vmor %vm148, %vm149
    %v151 = vsel %vm150, %v142, %v147
    %v152 = vmul.f32 %v120, %v151
    %v153 = vmul.f32 %v129, %v152
    %v154 = vsub.f32 %v121, %v153
    %v155 = vperm.slane %v152, 0
    %v156 = vmul.f32 %v118, %v155
    %v157 = vperm.slane %v154, 0
    %v158 = vadd.f32 %v156, %v157
    %v159 = vmax.f32 %v158, 0.0
    %v160 = vld [vmem:[%s1 + $0x28] sm:$0xff]
    %v161 = vld [vmem:[%s1 + $0x30] sm:$0xff]
    %v162 = vld [vmem:[%s1 + $0x38] sm:$0xff]
    %v163 = vld [vmem:[%s1 + $0x40] sm:$0xff]
    %v164 = vld [vmem:[%s1 + $0x4c] sm:$0x1]
    %v165 = vperm.slane %v164, 0
    %v167 = vsel %vm47, %v159, 0
    %169 = vmatpush.msra.mxu0 0.0
    %170 = vmatpush.msra.mxu0 0.0
    %171 = vmatpush.msra.mxu0 0.0
    %172 = vmatpush.msra.mxu0 0.0
    %173 = vmatpush.msra.mxu0 0.0
    %174 = vmatpush.msra.mxu0 0.0
    %175 = vmatpush.msra.mxu0 0.0
    %176 = vmatpush.msra.mxu0 0.0
    %177 = vmatpush.msra.mxu0 0.0
    %178 = vmatpush.msra.mxu0 0.0
    %179 = vmatpush.msra.mxu0 0.0
    %180 = vmatpush.msra.mxu0 0.0
    %181 = vmatpush.msra.mxu0 %v163
    %182 = vmatpush.msra.mxu0 %v162
    %183 = vmatpush.msra.mxu0 %v161
    %184 = vmatpush.msra.mxu0 %v160
    %185 = vmatmul.f32.gmra.mxu0 %v167
    %v186 = vpop.f32.mrf.mxu0
    %v187 = vadd.f32 %v165, %v186
    %188 = vdwg.mxu0
    %189 = vst.msk [vmem:[#allocation2] sm:$0xff] %vm47, %v187
    %191 = vrot.lane.b32.xlu0 %v187, 96
    %v192 = vpop.permute.xlu0 %191
    %194 = vst.msk [vmem:[#allocation4] sm:$0xff] %vm47, %v192
    // Predicated region
    $region10: #{tpu_custom_call.1} parent=1 // pred_check
      _
    $region11: #{tpu_custom_call.1} parent=1 // pred_check_branch
      %196 = sbr.rel (0) target = $region13
    $region12: #{tpu_custom_call.1} parent=1 // pred_region
      %198 = vsyncadd [#allocation3], 0
      %s200 = sshll.u32 [#allocation2], 4
      %s201 = int_to_ptr.vmem [resolvable:$true] %s200
      %s202 = sshll.u32 %s2, 4
      %s203 = int_to_ptr.hbm [resolvable:$true] %s202
      %205 = dma.vmem_to_hbm [thread:$0]  %s201, 128, %s203, [#allocation3]
    $region13: #{tpu_custom_call.1} parent=1 // pred_fallthru
      _
    // Predicated region
    $region14: #{tpu_custom_call.1} parent=1 // pred_check
      _
    $region15: #{tpu_custom_call.1} parent=1 // pred_check_branch
      %207 = sbr.rel (0) target = $region17
    $region16: #{tpu_custom_call.1} parent=1 // pred_region
      %209 = vsyncadd [#allocation5], 0
      %s211 = sshll.u32 [#allocation4], 4
      %s212 = int_to_ptr.vmem [resolvable:$true] %s211
      %s213 = sshll.u32 %s3, 4
      %s214 = int_to_ptr.hbm [resolvable:$true] %s213
      %216 = dma.vmem_to_hbm [thread:$0]  %s212, 128, %s214, [#allocation5]
    $region17: #{tpu_custom_call.1} parent=1 // pred_fallthru
      _
    // Predicated region
    $region18: #{tpu_custom_call.1} parent=1 // pred_check
      _
    $region19: #{tpu_custom_call.1} parent=1 // pred_check_branch
      %218 = sbr.rel (0) target = $region21
    $region20: #{tpu_custom_call.1} parent=1 // pred_region
      %220 = dma.done [#allocation3], 128
    $region21: #{tpu_custom_call.1} parent=1 // pred_fallthru
      _
    // Predicated region
    $region22: #{tpu_custom_call.1} parent=1 // pred_check
      _
    $region23: #{tpu_custom_call.1} parent=1 // pred_check_branch
      %222 = sbr.rel (0) target = $region25
    $region24: #{tpu_custom_call.1} parent=1 // pred_region
      %224 = dma.done [#allocation5], 128
    $region25: #{tpu_custom_call.1} parent=1 // pred_fallthru
      _
    %225 = vsyncpa [#allocation3], 1
    %226 = vsyncpa [#allocation5], 1

</llo_original>
